<compile_context>
chip_gen: v7x
topology: tpu7x:2x2x1
jax: 0.10.0
libtpu: 0.0.40
codegen_flags: <defaults>
</compile_context>

<pallas_src>
import jax
import jax.numpy as jnp
from jax.experimental import pallas as pl
from jax.experimental.pallas import tpu as pltpu

LANE = 128      # vreg lane width
SUBLANE = 8     # f32 sublane count


def _round_up(x, m):
    return ((x + m - 1) // m) * m


def _ceil_div(a, b):
    return -(-a // b)


# -----------------------------------------------------------------------------
# Kernel: fused (Linear -> ReLU) x3 -> Linear on one batch tile.
# x is f32 (tb, input_size); weights are bf16, lane-dense (hidden padded to
# 128); biases packed f32 (4, 128); output is a narrow (tb, output_size) f32
# store (masked vst is cheap here -- HBM bandwidth, not the VST slot, is the
# roofline).
# -----------------------------------------------------------------------------
def mlp_listener_kernel(x_ref, w1_ref, w2_ref, w3_ref, w4_ref, b_ref, o_ref):
    out_size = o_ref.shape[-1]

    x = x_ref[...].astype(jnp.bfloat16)     # (tb, IN)  bf16 (cast on VPU)
    b = b_ref[...]                          # (4, FEAT) f32

    # Layer 1: Linear + ReLU
    h = jnp.dot(x, w1_ref[...], preferred_element_type=jnp.float32) + b[0:1, :]
    h = jnp.maximum(h, 0.0)

    # Layer 2: Linear + ReLU
    h = jnp.dot(h.astype(jnp.bfloat16), w2_ref[...],
                preferred_element_type=jnp.float32) + b[1:2, :]
    h = jnp.maximum(h, 0.0)

    # Layer 3: Linear + ReLU
    h = jnp.dot(h.astype(jnp.bfloat16), w3_ref[...],
                preferred_element_type=jnp.float32) + b[2:3, :]
    h = jnp.maximum(h, 0.0)

    # Layer 4: Linear (no activation)
    y = jnp.dot(h.astype(jnp.bfloat16), w4_ref[...],
                preferred_element_type=jnp.float32) + b[3:4, :]

    # Narrow f32 store: only the real output columns go back to HBM.
    o_ref[...] = y[:, :out_size]


# -----------------------------------------------------------------------------
# Parameter packing: hidden/output dims zero-padded to one 128-lane block,
# weights cast to bf16 once; w1's K dim stays at the true input_size (no
# padded-K columns -> kernel can consume unpadded x directly). All four
# biases packed into a single (4, 128) f32 array.
# -----------------------------------------------------------------------------
def pack_params(params, input_size, hidden_size, output_size):
    feat = _round_up(max(hidden_size, output_size), LANE)

    def pad_w(w, rows, cols):
        buf = jnp.zeros((rows, cols), jnp.float32)
        buf = buf.at[: w.shape[0], : w.shape[1]].set(w)
        return buf.astype(jnp.bfloat16)

    w1 = pad_w(params["w1"], input_size, feat)   # (96, 128)
    w2 = pad_w(params["w2"], feat, feat)
    w3 = pad_w(params["w3"], feat, feat)
    w4 = pad_w(params["w4"], feat, feat)

    b = jnp.zeros((4, feat), jnp.float32)
    for i in range(4):
        bi = params[f"b{i + 1}"].reshape(-1)
        b = b.at[i, : bi.shape[0]].set(bi)

    return {
        "w1": w1, "w2": w2, "w3": w3, "w4": w4, "b": b,
        "input_size": input_size, "output_size": output_size, "feat": feat,
    }


# -----------------------------------------------------------------------------
# Wrapper: batch-tiled pallas_call with VMEM-resident weights.
# -----------------------------------------------------------------------------
def mlp_listener_forward(x, packed, *, block_batch=2048):
    batch, in_features = x.shape
    assert in_features == packed["input_size"]
    feat = packed["feat"]
    out_size = packed["output_size"]

    # Balanced batch tiles: big enough to amortize the ~0.35us per-step
    # overhead, but keep >=2 grid steps for large batches so the "parallel"
    # axis shards across both v7x TensorCores.
    n_steps = max(1, _ceil_div(batch, block_batch))
    if batch >= 1024:
        n_steps = max(n_steps, 2)
    tb = _round_up(_ceil_div(batch, n_steps), SUBLANE)
    padded_batch = _round_up(batch, tb)

    # Only the (cheap) batch dim is padded; features stay at the true width
    # and x stays f32 (the bf16 cast happens in-kernel, no extra HBM pass).
    if padded_batch != batch:
        x_in = jnp.pad(x, ((0, padded_batch - batch), (0, 0)))
    else:
        x_in = x

    grid = (padded_batch // tb,)

    out = pl.pallas_call(
        mlp_listener_kernel,
        out_shape=jax.ShapeDtypeStruct((padded_batch, out_size), jnp.float32),
        grid=grid,
        in_specs=[
            pl.BlockSpec((tb, in_features), lambda i: (i, 0)),       # x tile
            pl.BlockSpec((in_features, feat), lambda i: (0, 0)),     # w1 (resident)
            pl.BlockSpec((feat, feat), lambda i: (0, 0)),            # w2 (resident)
            pl.BlockSpec((feat, feat), lambda i: (0, 0)),            # w3 (resident)
            pl.BlockSpec((feat, feat), lambda i: (0, 0)),            # w4 (resident)
            pl.BlockSpec((4, feat), lambda i: (0, 0)),               # packed biases
        ],
        out_specs=pl.BlockSpec((tb, out_size), lambda i: (i, 0)),
        compiler_params=pltpu.CompilerParams(
            dimension_semantics=("parallel",)),
    )(x_in, packed["w1"], packed["w2"], packed["w3"], packed["w4"], packed["b"])

    return out[:batch] if padded_batch != batch else out


# -----------------------------------------------------------------------------
# Deterministic init (PyTorch-Linear-style uniform bounds), f32 master params.
# -----------------------------------------------------------------------------
def init_params(key, input_size, hidden_size, output_size):
    dims = [(input_size, hidden_size),
            (hidden_size, hidden_size),
            (hidden_size, hidden_size),
            (hidden_size, output_size)]
    params = {}
    for i, (fan_in, fan_out) in enumerate(dims, start=1):
        key, kw, kb = jax.random.split(key, 3)
        bound = 1.0 / (fan_in ** 0.5)
        params[f"w{i}"] = jax.random.uniform(
            kw, (fan_in, fan_out), jnp.float32, minval=-bound, maxval=bound)
        params[f"b{i}"] = jax.random.uniform(
            kb, (fan_out,), jnp.float32, minval=-bound, maxval=bound)
    return params


if __name__ == "__main__":
    # Synthetic grammar: grid_size=4, 4 semantics each of max length 4.
    grid_size = 4
    hidden_size = 32
    input_size = 6 * grid_size ** 2          # 96
    output_size = 4 * 4                      # 16
    batch = 60                               # non-multiple of 8: exercises batch pad + slice

    key = jax.random.PRNGKey(0)
    key, kx = jax.random.split(key)
    x = jax.random.normal(kx, (batch, input_size), dtype=jnp.float32)

    params = init_params(key, input_size, hidden_size, output_size)
    packed = pack_params(params, input_size, hidden_size, output_size)

    out = mlp_listener_forward(x, packed)    # production default block_batch
    jax.block_until_ready(out)

    # Correctness check against plain-JAX f32 reference (relaxed tolerance:
    # matmul operands are rounded to bf16 before f32-accumulated MXU matmul).
    h = x
    for i in range(1, 4):
        h = jnp.maximum(h @ params[f"w{i}"] + params[f"b{i}"], 0.0)
    ref = h @ params["w4"] + params["b4"]

    assert out.shape == (batch, output_size)
    assert jnp.allclose(out, ref, atol=5e-2, rtol=5e-2), float(
        jnp.max(jnp.abs(out - ref)))

    print("KERNEL_OK")
</pallas_src>

<mosaic_0001>
module attributes {stable_mosaic.version = 11 : i64} {
  func.func @mlp_listener_kernel(%arg0: i32, %arg1: memref<64x96xf32, #tpu.memory_space<vmem>>, %arg2: memref<96x128xbf16, #tpu.memory_space<vmem>>, %arg3: memref<128x128xbf16, #tpu.memory_space<vmem>>, %arg4: memref<128x128xbf16, #tpu.memory_space<vmem>>, %arg5: memref<128x128xbf16, #tpu.memory_space<vmem>>, %arg6: memref<4x128xf32, #tpu.memory_space<vmem>>, %arg7: memref<64x16xf32, #tpu.memory_space<vmem>>) attributes {dimension_semantics = [#tpu.dimension_semantics<parallel>], iteration_bounds = array<i64: 1>, scalar_prefetch = 0 : i64, scratch_operands = 0 : i64, tpu.core_type = #tpu.core_type<tc>, window_params = [{transform_indices = @transform_0, window_bounds = array<i64: 64, 96>}, {pipeline_mode = #tpu.pipeline_mode<synchronous>, transform_indices = @transform_1, window_bounds = array<i64: 96, 128>}, {pipeline_mode = #tpu.pipeline_mode<synchronous>, transform_indices = @transform_2, window_bounds = array<i64: 128, 128>}, {pipeline_mode = #tpu.pipeline_mode<synchronous>, transform_indices = @transform_3, window_bounds = array<i64: 128, 128>}, {pipeline_mode = #tpu.pipeline_mode<synchronous>, transform_indices = @transform_4, window_bounds = array<i64: 128, 128>}, {pipeline_mode = #tpu.pipeline_mode<synchronous>, transform_indices = @transform_5, window_bounds = array<i64: 4, 128>}, {transform_indices = @transform_6, window_bounds = array<i64: 64, 16>}]} {
    %c0 = arith.constant 0 : index
    %c0_0 = arith.constant 0 : index
    %0 = vector.load %arg1[%c0, %c0_0] : memref<64x96xf32, #tpu.memory_space<vmem>>, vector<64x96xf32>
    %1 = arith.truncf %0 : vector<64x96xf32> to vector<64x96xbf16>
    %c0_1 = arith.constant 0 : index
    %c0_2 = arith.constant 0 : index
    %2 = vector.load %arg6[%c0_1, %c0_2] : memref<4x128xf32, #tpu.memory_space<vmem>>, vector<4x128xf32>
    %c0_3 = arith.constant 0 : index
    %c0_4 = arith.constant 0 : index
    %3 = vector.load %arg2[%c0_3, %c0_4] : memref<96x128xbf16, #tpu.memory_space<vmem>>, vector<96x128xbf16>
    %cst = arith.constant dense<0.000000e+00> : vector<64x128xf32>
    %4 = tpu.matmul %1, %3, %cst {dimension_numbers = #tpu.dot_dimension_numbers<[1], [0], [0], [1], [0, 0, 1, 1], [], []>} : vector<64x96xbf16>, vector<96x128xbf16>, vector<64x128xf32> -> vector<64x128xf32>
    %5 = vector.extract_strided_slice %2 {offsets = [0, 0], sizes = [1, 128], strides = [1, 1]} : vector<4x128xf32> to vector<1x128xf32>
    %6 = vector.broadcast %5 : vector<1x128xf32> to vector<64x128xf32>
    %7 = arith.addf %4, %6 : vector<64x128xf32>
    %cst_5 = arith.constant 0.000000e+00 : f32
    %8 = vector.broadcast %cst_5 : f32 to vector<64x128xf32>
    %9 = arith.maximumf %7, %8 : vector<64x128xf32>
    %10 = arith.truncf %9 : vector<64x128xf32> to vector<64x128xbf16>
    %c0_6 = arith.constant 0 : index
    %c0_7 = arith.constant 0 : index
    %11 = vector.load %arg3[%c0_6, %c0_7] : memref<128x128xbf16, #tpu.memory_space<vmem>>, vector<128x128xbf16>
    %cst_8 = arith.constant dense<0.000000e+00> : vector<64x128xf32>
    %12 = tpu.matmul %10, %11, %cst_8 {dimension_numbers = #tpu.dot_dimension_numbers<[1], [0], [0], [1], [0, 0, 1, 1], [], []>} : vector<64x128xbf16>, vector<128x128xbf16>, vector<64x128xf32> -> vector<64x128xf32>
    %13 = vector.extract_strided_slice %2 {offsets = [1, 0], sizes = [1, 128], strides = [1, 1]} : vector<4x128xf32> to vector<1x128xf32>
    %14 = vector.broadcast %13 : vector<1x128xf32> to vector<64x128xf32>
    %15 = arith.addf %12, %14 : vector<64x128xf32>
    %cst_9 = arith.constant 0.000000e+00 : f32
    %16 = vector.broadcast %cst_9 : f32 to vector<64x128xf32>
    %17 = arith.maximumf %15, %16 : vector<64x128xf32>
    %18 = arith.truncf %17 : vector<64x128xf32> to vector<64x128xbf16>
    %c0_10 = arith.constant 0 : index
    %c0_11 = arith.constant 0 : index
    %19 = vector.load %arg4[%c0_10, %c0_11] : memref<128x128xbf16, #tpu.memory_space<vmem>>, vector<128x128xbf16>
    %cst_12 = arith.constant dense<0.000000e+00> : vector<64x128xf32>
    %20 = tpu.matmul %18, %19, %cst_12 {dimension_numbers = #tpu.dot_dimension_numbers<[1], [0], [0], [1], [0, 0, 1, 1], [], []>} : vector<64x128xbf16>, vector<128x128xbf16>, vector<64x128xf32> -> vector<64x128xf32>
    %21 = vector.extract_strided_slice %2 {offsets = [2, 0], sizes = [1, 128], strides = [1, 1]} : vector<4x128xf32> to vector<1x128xf32>
    %22 = vector.broadcast %21 : vector<1x128xf32> to vector<64x128xf32>
    %23 = arith.addf %20, %22 : vector<64x128xf32>
    %cst_13 = arith.constant 0.000000e+00 : f32
    %24 = vector.broadcast %cst_13 : f32 to vector<64x128xf32>
    %25 = arith.maximumf %23, %24 : vector<64x128xf32>
    %26 = arith.truncf %25 : vector<64x128xf32> to vector<64x128xbf16>
    %c0_14 = arith.constant 0 : index
    %c0_15 = arith.constant 0 : index
    %27 = vector.load %arg5[%c0_14, %c0_15] : memref<128x128xbf16, #tpu.memory_space<vmem>>, vector<128x128xbf16>
    %cst_16 = arith.constant dense<0.000000e+00> : vector<64x128xf32>
    %28 = tpu.matmul %26, %27, %cst_16 {dimension_numbers = #tpu.dot_dimension_numbers<[1], [0], [0], [1], [0, 0, 1, 1], [], []>} : vector<64x128xbf16>, vector<128x128xbf16>, vector<64x128xf32> -> vector<64x128xf32>
    %29 = vector.extract_strided_slice %2 {offsets = [3, 0], sizes = [1, 128], strides = [1, 1]} : vector<4x128xf32> to vector<1x128xf32>
    %30 = vector.broadcast %29 : vector<1x128xf32> to vector<64x128xf32>
    %31 = arith.addf %28, %30 : vector<64x128xf32>
    %32 = vector.extract_strided_slice %31 {offsets = [0, 0], sizes = [64, 16], strides = [1, 1]} : vector<64x128xf32> to vector<64x16xf32>
    %c0_17 = arith.constant 0 : index
    %c0_18 = arith.constant 0 : index
    %33 = vector.load %arg7[%c0_17, %c0_18] : memref<64x16xf32, #tpu.memory_space<vmem>>, vector<64x16xf32>
    tpu.vector_store %arg7[%c0_17, %c0_18], %32 {strides = array<i32>} : memref<64x16xf32, #tpu.memory_space<vmem>>, vector<64x16xf32>,
    return
  }
  func.func @transform_0(%arg0: i32) -> (i32, i32) {
    %c0_i32 = arith.constant 0 : i32
    %c0_i32_0 = arith.constant 0 : i32
    return %arg0, %c0_i32 : i32, i32
  }
  func.func @transform_1(%arg0: i32) -> (i32, i32) {
    %c0_i32 = arith.constant 0 : i32
    %c0_i32_0 = arith.constant 0 : i32
    %c0_i32_1 = arith.constant 0 : i32
    return %c0_i32, %c0_i32_0 : i32, i32
  }
  func.func @transform_2(%arg0: i32) -> (i32, i32) {
    %c0_i32 = arith.constant 0 : i32
    %c0_i32_0 = arith.constant 0 : i32
    %c0_i32_1 = arith.constant 0 : i32
    return %c0_i32, %c0_i32_0 : i32, i32
  }
  func.func @transform_3(%arg0: i32) -> (i32, i32) {
    %c0_i32 = arith.constant 0 : i32
    %c0_i32_0 = arith.constant 0 : i32
    %c0_i32_1 = arith.constant 0 : i32
    return %c0_i32, %c0_i32_0 : i32, i32
  }
  func.func @transform_4(%arg0: i32) -> (i32, i32) {
    %c0_i32 = arith.constant 0 : i32
    %c0_i32_0 = arith.constant 0 : i32
    %c0_i32_1 = arith.constant 0 : i32
    return %c0_i32, %c0_i32_0 : i32, i32
  }
  func.func @transform_5(%arg0: i32) -> (i32, i32) {
    %c0_i32 = arith.constant 0 : i32
    %c0_i32_0 = arith.constant 0 : i32
    %c0_i32_1 = arith.constant 0 : i32
    return %c0_i32, %c0_i32_0 : i32, i32
  }
  func.func @transform_6(%arg0: i32) -> (i32, i32) {
    %c0_i32 = arith.constant 0 : i32
    %c0_i32_0 = arith.constant 0 : i32
    return %arg0, %c0_i32 : i32, i32
  }
}

</mosaic_0001>

<llo_original>
// kernel: tpu_custom_call.1
$region0: #{tpu_custom_call.1}
  #allocation0 [shape = 'u32[]', space=smem, size = 0x4, offset = 0x4, fixed_abs, tag = 'smem constant byte address 0x4 - core index']
  #allocation1 [shape = 'u32[144,128]{1,0:T(1,128)}', space=vmem, size = 0x12000, scoped, tag = 'internal scratch']
  %s0 = inlined_call_operand.hbm [shape: f32[64,96], index: 0, kind: input, shape index: {}]
  %s1 = inlined_call_operand.hbm [shape: bf16[96,128], index: 1, kind: input, shape index: {}]
  %s2 = inlined_call_operand.hbm [shape: bf16[128,128], index: 2, kind: input, shape index: {}]
  %s3 = inlined_call_operand.hbm [shape: bf16[128,128], index: 3, kind: input, shape index: {}]
  %s4 = inlined_call_operand.hbm [shape: bf16[128,128], index: 4, kind: input, shape index: {}]
  %s5 = inlined_call_operand.vmem [shape: f32[4,128], index: 5, kind: input, shape index: {}]
  %s6 = inlined_call_operand.vmem [shape: f32[64,16], index: 6, kind: output, shape index: {}]
  %s7 = sld [smem:[#allocation0]]
  $region54: #{tpu_custom_call.1} parent=0
    _
  %s9 = ssub.s32 1, %s7
  %s10 = scalar_select 0, %s9, %s7
  $region1: #{tpu_custom_call.1} parent=0
    #allocation2 [shape = 'u8[32768]{0}', space=vmem, size = 0x8000, scoped, tag = 'input window, operand 0, single buffered']
    #allocation3 [shape = 's32[1]{0}', space=sflag, size = 0x4, scoped, tag = 'scoped memory for tpu_custom_call.1']
    #allocation4 [shape = 'u8[24576]{0}', space=vmem, size = 0x6000, scoped, tag = 'input window, operand 1, single buffered']
    #allocation5 [shape = 's32[1]{0}', space=sflag, size = 0x4, scoped, tag = 'scoped memory for tpu_custom_call.1']
    #allocation6 [shape = 'u8[32768]{0}', space=vmem, size = 0x8000, scoped, tag = 'input window, operand 2, single buffered']
    #allocation7 [shape = 'u8[32768]{0}', space=vmem, size = 0x8000, scoped, tag = 'input window, operand 3, single buffered']
    #allocation8 [shape = 's32[1]{0}', space=sflag, size = 0x4, scoped, tag = 'scoped memory for tpu_custom_call.1']
    #allocation9 [shape = 'u8[32768]{0}', space=vmem, size = 0x8000, scoped, tag = 'input window, operand 4, single buffered']
    %11 = vsyncpa [#allocation3], 0
    %12 = vsyncpa [#allocation5], 0
    %13 = vsyncpa [#allocation8], 0
    // Predicated region
    $region2: #{tpu_custom_call.1} parent=1 // pred_check
      _
    $region3: #{tpu_custom_call.1} parent=1 // pred_check_branch
      %15 = sbr.rel (0) target = $region5
    $region4: #{tpu_custom_call.1} parent=1 // pred_region
      %s17 = ssub.s32 1024, 1024
      %18 = vsyncadd [#allocation3], %s17
      %s19 = sshll.u32 [#allocation2], 4
      %s20 = int_to_ptr.vmem [resolvable:$true] %s19
      %25 = dma.hbm_to_vmem [thread:$0]  %s0, 1024, %s20, [#allocation3], 128, 128, 8
    $region5: #{tpu_custom_call.1} parent=1 // pred_fallthru
      _
    // Predicated region
    $region6: #{tpu_custom_call.1} parent=1 // pred_check
      _
    $region7: #{tpu_custom_call.1} parent=1 // pred_check_branch
      %27 = sbr.rel (0) target = $region9
    $region8: #{tpu_custom_call.1} parent=1 // pred_region
      %s29 = ssub.s32 768, 768
      %30 = vsyncadd [#allocation5], %s29
      %s31 = sshll.u32 [#allocation4], 4
      %s32 = int_to_ptr.vmem [resolvable:$true] %s31
      %37 = dma.hbm_to_vmem [thread:$0]  %s1, 768, %s32, [#allocation5], 64, 64, 4
    $region9: #{tpu_custom_call.1} parent=1 // pred_fallthru
      _
    // Predicated region
    $region10: #{tpu_custom_call.1} parent=1 // pred_check
      _
    $region11: #{tpu_custom_call.1} parent=1 // pred_check_branch
      %39 = sbr.rel (0) target = $region13
    $region12: #{tpu_custom_call.1} parent=1 // pred_region
      %s41 = ssub.s32 1024, 1024
      %42 = vsyncadd [#allocation5], %s41
      %s43 = sshll.u32 [#allocation6], 4
      %s44 = int_to_ptr.vmem [resolvable:$true] %s43
      %49 = dma.hbm_to_vmem [thread:$0]  %s2, 1024, %s44, [#allocation5], 64, 64, 4
    $region13: #{tpu_custom_call.1} parent=1 // pred_fallthru
      _
    // Predicated region
    $region14: #{tpu_custom_call.1} parent=1 // pred_check
      _
    $region15: #{tpu_custom_call.1} parent=1 // pred_check_branch
      %51 = sbr.rel (0) target = $region17
    $region16: #{tpu_custom_call.1} parent=1 // pred_region
      %s53 = ssub.s32 1024, 1024
      %54 = vsyncadd [#allocation8], %s53
      %s55 = sshll.u32 [#allocation7], 4
      %s56 = int_to_ptr.vmem [resolvable:$true] %s55
      %61 = dma.hbm_to_vmem [thread:$0]  %s3, 1024, %s56, [#allocation8], 64, 64, 4
    $region17: #{tpu_custom_call.1} parent=1 // pred_fallthru
      _
    // Predicated region
    $region18: #{tpu_custom_call.1} parent=1 // pred_check
      _
    $region19: #{tpu_custom_call.1} parent=1 // pred_check_branch
      %63 = sbr.rel (0) target = $region21
    $region20: #{tpu_custom_call.1} parent=1 // pred_region
      %s65 = ssub.s32 1024, 1024
      %66 = vsyncadd [#allocation8], %s65
      %s67 = sshll.u32 [#allocation9], 4
      %s68 = int_to_ptr.vmem [resolvable:$true] %s67
      %73 = dma.hbm_to_vmem [thread:$0]  %s4, 1024, %s68, [#allocation8], 64, 64, 4
    $region21: #{tpu_custom_call.1} parent=1 // pred_fallthru
      _
    // Predicated region
    $region22: #{tpu_custom_call.1} parent=1 // pred_check
      _
    $region23: #{tpu_custom_call.1} parent=1 // pred_check_branch
      %75 = sbr.rel (0) target = $region25
    $region24: #{tpu_custom_call.1} parent=1 // pred_region
      _
    $region25: #{tpu_custom_call.1} parent=1 // pred_fallthru
      _
    // Predicated region
    $region26: #{tpu_custom_call.1} parent=1 // pred_check
      _
    $region27: #{tpu_custom_call.1} parent=1 // pred_check_branch
      %77 = sbr.rel (0) target = $region29
    $region28: #{tpu_custom_call.1} parent=1 // pred_region
      %78 = dma.done [#allocation3], 1024
    $region29: #{tpu_custom_call.1} parent=1 // pred_fallthru
      _
    // Predicated region
    $region30: #{tpu_custom_call.1} parent=1 // pred_check
      _
    $region31: #{tpu_custom_call.1} parent=1 // pred_check_branch
      %80 = sbr.rel (0) target = $region33
    $region32: #{tpu_custom_call.1} parent=1 // pred_region
      %81 = dma.done [#allocation5], 768
    $region33: #{tpu_custom_call.1} parent=1 // pred_fallthru
      _
    // Predicated region
    $region34: #{tpu_custom_call.1} parent=1 // pred_check
      _
    $region35: #{tpu_custom_call.1} parent=1 // pred_check_branch
      %83 = sbr.rel (0) target = $region37
    $region36: #{tpu_custom_call.1} parent=1 // pred_region
      %84 = dma.done [#allocation5], 1024
    $region37: #{tpu_custom_call.1} parent=1 // pred_fallthru
      _
    // Predicated region
    $region38: #{tpu_custom_call.1} parent=1 // pred_check
      _
    $region39: #{tpu_custom_call.1} parent=1 // pred_check_branch
      %86 = sbr.rel (0) target = $region41
    $region40: #{tpu_custom_call.1} parent=1 // pred_region
      %87 = dma.done [#allocation8], 1024
    $region41: #{tpu_custom_call.1} parent=1 // pred_fallthru
      _
    // Predicated region
    $region42: #{tpu_custom_call.1} parent=1 // pred_check
      _
    $region43: #{tpu_custom_call.1} parent=1 // pred_check_branch
      %89 = sbr.rel (0) target = $region45
    $region44: #{tpu_custom_call.1} parent=1 // pred_region
      %90 = dma.done [#allocation8], 1024
    $region45: #{tpu_custom_call.1} parent=1 // pred_fallthru
      _
    %v92 = vld [vmem:[#allocation2] sm:$0xff]
    %v93 = vld [vmem:[#allocation2 + $0x8] sm:$0xff]
    %v94 = vld [vmem:[#allocation2 + $0x10] sm:$0xff]
    %v95 = vld [vmem:[#allocation2 + $0x18] sm:$0xff]
    %v96 = vld [vmem:[#allocation2 + $0x20] sm:$0xff]
    %v97 = vld [vmem:[#allocation2 + $0x28] sm:$0xff]
    %v98 = vld [vmem:[#allocation2 + $0x30] sm:$0xff]
    %v99 = vld [vmem:[#allocation2 + $0x38] sm:$0xff]
    %v100 = vpack.c.bf16 %v93, %v92
    %v101 = vpack.c.bf16 %v95, %v94
    %v102 = vpack.c.bf16 %v97, %v96
    %v103 = vpack.c.bf16 %v99, %v98
    %v104 = vld [vmem:[%s5] sm:$0xf]
    %v105 = vld [vmem:[#allocation4] sm:$0xf]
    %v106 = vld [vmem:[#allocation4 + $0x4] sm:$0xf]
    %v107 = vld [vmem:[#allocation4 + $0x8] sm:$0xf]
    %v108 = vld [vmem:[#allocation4 + $0xc] sm:$0xf]
    %v109 = vld [vmem:[#allocation4 + $0x10] sm:$0xf]
    %v110 = vld [vmem:[#allocation4 + $0x14] sm:$0xf]
    %v111 = vld [vmem:[#allocation4 + $0x18] sm:$0xf]
    %v112 = vld [vmem:[#allocation4 + $0x1c] sm:$0xf]
    %v113 = vld [vmem:[#allocation4 + $0x20] sm:$0xf]
    %v114 = vld [vmem:[#allocation4 + $0x24] sm:$0xf]
    %v115 = vld [vmem:[#allocation4 + $0x28] sm:$0xf]
    %v116 = vld [vmem:[#allocation4 + $0x2c] sm:$0xf]
    %v117 = vlaneseq
    %v118 = vshrl.u32 %v117, 7
    %v119 = vsub.s32 0, %v118
    %v120 = vrot.slane %v104, %v119
    %v133 = vunpack.c.l.b16 %v105
    %v134 = vunpack.c.l.b16 %v106
    %v135 = vunpack.c.l.b16 %v107
    %v136 = vunpack.c.l.b16 %v108
    %v137 = vunpack.c.l.b16 %v109
    %v138 = vunpack.c.l.b16 %v110
    %v139 = vunpack.c.l.b16 %v111
    %v140 = vunpack.c.l.b16 %v112
    %v141 = vunpack.c.l.b16 %v113
    %v142 = vunpack.c.l.b16 %v114
    %v143 = vunpack.c.l.b16 %v115
    %v144 = vunpack.c.l.b16 %v116
    %v145 = vpack.c.b16 %v134, %v133
    %v146 = vpack.c.b16 %v136, %v135
    %v147 = vpack.c.b16 %v138, %v137
    %v148 = vpack.c.b16 %v140, %v139
    %v149 = vpack.c.b16 %v142, %v141
    %v150 = vpack.c.b16 %v144, %v143
    %vm157 = vcmask 785408
    %v159 = vsel %vm157, %v100, 0
    %v162 = vsel %vm157, %v101, 0
    %v165 = vsel %vm157, %v102, 0
    %v168 = vsel %vm157, %v103, 0
    %170 = vmatprep.subr.bf16.mxu0 0
    %171 = vmatpush1.bf16.msra.mxu0 %v145
    %172 = vmatprep.subr.bf16.mxu0 0
    %173 = vmatpush1.bf16.msra.mxu0 %v146
    %174 = vmatprep.subr.bf16.mxu0 0
    %175 = vmatpush1.bf16.msra.mxu0 %v147
    %176 = vmatprep.subr.bf16.mxu0 0
    %177 = vmatpush1.bf16.msra.mxu0 %v148
    %178 = vmatprep.subr.bf16.mxu0 0
    %179 = vmatpush1.bf16.msra.mxu0 %v149
    %180 = vmatprep.subr.bf16.mxu0 0
    %181 = vmatpush1.bf16.msra.mxu0 %v150
    %182 = vmatprep.subr.bf16.mxu0 0
    %183 = vmatpush1.bf16.msra.mxu0 0
    %184 = vmatprep.subr.bf16.mxu0 0
    %185 = vmatpush1.bf16.msra.mxu0 0
    %186 = vmatprep.subr.bf16.mxu0 0
    %187 = vmatpush1.bf16.msra.mxu0 0
    %188 = vmatprep.subr.bf16.mxu0 0
    %189 = vmatpush1.bf16.msra.mxu0 0
    %190 = vmatprep.subr.bf16.mxu0 0
    %191 = vmatpush1.bf16.msra.mxu0 0
    %192 = vmatprep.subr.bf16.mxu0 0
    %193 = vmatpush1.bf16.msra.mxu0 0
    %194 = vmatprep.subr.bf16.mxu0 0
    %195 = vmatpush1.bf16.msra.mxu0 0
    %196 = vmatprep.subr.bf16.mxu0 0
    %197 = vmatpush1.bf16.msra.mxu0 0
    %198 = vmatprep.subr.bf16.mxu0 0
    %199 = vmatpush1.bf16.msra.mxu0 0
    %200 = vmatprep.subr.bf16.mxu0 0
    %201 = vmatpush1.bf16.msra.mxu0 0
    %202 = vmatprep.mubr.bf16.mxu0 0
    %203 = vmatmul.mubr.bf16.gmra.mrb[0].mxu0 %v159
    %v204 = vpop.f32.mrb[0].mxu0
    %v205 = vadd.f32 %v120, %v204
    %v206 = vpop.f32.mrb[0].mxu0
    %v207 = vpop.f32.mrb[0].mxu0
    %v208 = vadd.f32 %v120, %v207
    %v209 = vpop.f32.mrb[0].mxu0
    %210 = vmatprep.mubr.bf16.mxu0 0
    %211 = vmatmul.mubr.bf16.gmra.mrb[0].mxu0 %v162
    %v212 = vpop.f32.mrb[0].mxu0
    %v213 = vadd.f32 %v120, %v212
    %v214 = vpop.f32.mrb[0].mxu0
    %v215 = vpop.f32.mrb[0].mxu0
    %v216 = vadd.f32 %v120, %v215
    %v217 = vpop.f32.mrb[0].mxu0
    %218 = vmatprep.mubr.bf16.mxu0 0
    %219 = vmatmul.mubr.bf16.gmra.mrb[0].mxu0 %v165
    %v220 = vpop.f32.mrb[0].mxu0
    %v221 = vadd.f32 %v120, %v220
    %v222 = vpop.f32.mrb[0].mxu0
    %v223 = vpop.f32.mrb[0].mxu0
    %v224 = vadd.f32 %v120, %v223
    %v225 = vpop.f32.mrb[0].mxu0
    %226 = vmatprep.mubr.bf16.mxu0 0
    %227 = vmatmul.mubr.bf16.gmra.mrb[0].mxu0 %v168
    %v228 = vpop.f32.mrb[0].mxu0
    %v229 = vadd.f32 %v120, %v228
    %v230 = vpop.f32.mrb[0].mxu0
    %v231 = vpop.f32.mrb[0].mxu0
    %v232 = vadd.f32 %v120, %v231
    %v233 = vpop.f32.mrb[0].mxu0
    %234 = vdwg.mxu0
    %v235 = vmax.f32 %v205, 0.0
    %v236 = vmax.f32 %v208, 0.0
    %v237 = vmax.f32 %v213, 0.0
    %v238 = vmax.f32 %v216, 0.0
    %v239 = vmax.f32 %v221, 0.0
    %v240 = vmax.f32 %v224, 0.0
    %v241 = vmax.f32 %v229, 0.0
    %v242 = vmax.f32 %v232, 0.0
    %v243 = vpack.c.bf16 %v236, %v235
    %v244 = vpack.c.bf16 %v238, %v237
    %v245 = vpack.c.bf16 %v240, %v239
    %v246 = vpack.c.bf16 %v242, %v241
    %v247 = vld [vmem:[#allocation6] sm:$0xf]
    %v248 = vld [vmem:[#allocation6 + $0x4] sm:$0xf]
    %v249 = vld [vmem:[#allocation6 + $0x8] sm:$0xf]
    %v250 = vld [vmem:[#allocation6 + $0xc] sm:$0xf]
    %v251 = vld [vmem:[#allocation6 + $0x10] sm:$0xf]
    %v252 = vld [vmem:[#allocation6 + $0x14] sm:$0xf]
    %v253 = vld [vmem:[#allocation6 + $0x18] sm:$0xf]
    %v254 = vld [vmem:[#allocation6 + $0x1c] sm:$0xf]
    %v255 = vld [vmem:[#allocation6 + $0x20] sm:$0xf]
    %v256 = vld [vmem:[#allocation6 + $0x24] sm:$0xf]
    %v257 = vld [vmem:[#allocation6 + $0x28] sm:$0xf]
    %v258 = vld [vmem:[#allocation6 + $0x2c] sm:$0xf]
    %v259 = vld [vmem:[#allocation6 + $0x30] sm:$0xf]
    %v260 = vld [vmem:[#allocation6 + $0x34] sm:$0xf]
    %v261 = vld [vmem:[#allocation6 + $0x38] sm:$0xf]
    %v262 = vld [vmem:[#allocation6 + $0x3c] sm:$0xf]
    %v263 = vlaneseq
    %v264 = vshrl.u32 %v263, 7
    %v265 = vsub.s32 1, %v264
    %v266 = vrot.slane %v104, %v265
    %v283 = vunpack.c.l.b16 %v247
    %v284 = vunpack.c.l.b16 %v248
    %v285 = vunpack.c.l.b16 %v249
    %v286 = vunpack.c.l.b16 %v250
    %v287 = vunpack.c.l.b16 %v251
    %v288 = vunpack.c.l.b16 %v252
    %v289 = vunpack.c.l.b16 %v253
    %v290 = vunpack.c.l.b16 %v254
    %v291 = vunpack.c.l.b16 %v255
    %v292 = vunpack.c.l.b16 %v256
    %v293 = vunpack.c.l.b16 %v257
    %v294 = vunpack.c.l.b16 %v258
    %v295 = vunpack.c.l.b16 %v259
    %v296 = vunpack.c.l.b16 %v260
    %v297 = vunpack.c.l.b16 %v261
    %v298 = vunpack.c.l.b16 %v262
    %v299 = vpack.c.b16 %v284, %v283
    %v300 = vpack.c.b16 %v286, %v285
    %v301 = vpack.c.b16 %v288, %v287
    %v302 = vpack.c.b16 %v290, %v289
    %v303 = vpack.c.b16 %v292, %v291
    %v304 = vpack.c.b16 %v294, %v293
    %v305 = vpack.c.b16 %v296, %v295
    %v306 = vpack.c.b16 %v298, %v297
    %315 = vmatprep.subr.bf16.mxu0 0
    %316 = vmatpush1.bf16.msra.mxu0 %v299
    %317 = vmatprep.subr.bf16.mxu0 0
    %318 = vmatpush1.bf16.msra.mxu0 %v300
    %319 = vmatprep.subr.bf16.mxu0 0
    %320 = vmatpush1.bf16.msra.mxu0 %v301
    %321 = vmatprep.subr.bf16.mxu0 0
    %322 = vmatpush1.bf16.msra.mxu0 %v302
    %323 = vmatprep.subr.bf16.mxu0 0
    %324 = vmatpush1.bf16.msra.mxu0 %v303
    %325 = vmatprep.subr.bf16.mxu0 0
    %326 = vmatpush1.bf16.msra.mxu0 %v304
    %327 = vmatprep.subr.bf16.mxu0 0
    %328 = vmatpush1.bf16.msra.mxu0 %v305
    %329 = vmatprep.subr.bf16.mxu0 0
    %330 = vmatpush1.bf16.msra.mxu0 %v306
    %331 = vmatprep.subr.bf16.mxu0 0
    %332 = vmatpush1.bf16.msra.mxu0 0
    %333 = vmatprep.subr.bf16.mxu0 0
    %334 = vmatpush1.bf16.msra.mxu0 0
    %335 = vmatprep.subr.bf16.mxu0 0
    %336 = vmatpush1.bf16.msra.mxu0 0
    %337 = vmatprep.subr.bf16.mxu0 0
    %338 = vmatpush1.bf16.msra.mxu0 0
    %339 = vmatprep.subr.bf16.mxu0 0
    %340 = vmatpush1.bf16.msra.mxu0 0
    %341 = vmatprep.subr.bf16.mxu0 0
    %342 = vmatpush1.bf16.msra.mxu0 0
    %343 = vmatprep.subr.bf16.mxu0 0
    %344 = vmatpush1.bf16.msra.mxu0 0
    %345 = vmatprep.subr.bf16.mxu0 0
    %346 = vmatpush1.bf16.msra.mxu0 0
    %347 = vmatprep.mubr.bf16.mxu0 0
    %348 = vmatmul.mubr.bf16.gmra.mrb[0].mxu0 %v243
    %v349 = vpop.f32.mrb[0].mxu0
    %v350 = vadd.f32 %v266, %v349
    %v351 = vpop.f32.mrb[0].mxu0
    %v352 = vpop.f32.mrb[0].mxu0
    %v353 = vadd.f32 %v266, %v352
    %v354 = vpop.f32.mrb[0].mxu0
    %355 = vmatprep.mubr.bf16.mxu0 0
    %356 = vmatmul.mubr.bf16.gmra.mrb[0].mxu0 %v244
    %v357 = vpop.f32.mrb[0].mxu0
    %v358 = vadd.f32 %v266, %v357
    %v359 = vpop.f32.mrb[0].mxu0
    %v360 = vpop.f32.mrb[0].mxu0
    %v361 = vadd.f32 %v266, %v360
    %v362 = vpop.f32.mrb[0].mxu0
    %363 = vmatprep.mubr.bf16.mxu0 0
    %364 = vmatmul.mubr.bf16.gmra.mrb[0].mxu0 %v245
    %v365 = vpop.f32.mrb[0].mxu0
    %v366 = vadd.f32 %v266, %v365
    %v367 = vpop.f32.mrb[0].mxu0
    %v368 = vpop.f32.mrb[0].mxu0
    %v369 = vadd.f32 %v266, %v368
    %v370 = vpop.f32.mrb[0].mxu0
    %371 = vmatprep.mubr.bf16.mxu0 0
    %372 = vmatmul.mubr.bf16.gmra.mrb[0].mxu0 %v246
    %v373 = vpop.f32.mrb[0].mxu0
    %v374 = vadd.f32 %v266, %v373
    %v375 = vpop.f32.mrb[0].mxu0
    %v376 = vpop.f32.mrb[0].mxu0
    %v377 = vadd.f32 %v266, %v376
    %v378 = vpop.f32.mrb[0].mxu0
    %379 = vdwg.mxu0
    %v380 = vmax.f32 %v350, 0.0
    %v381 = vmax.f32 %v353, 0.0
    %v382 = vmax.f32 %v358, 0.0
    %v383 = vmax.f32 %v361, 0.0
    %v384 = vmax.f32 %v366, 0.0
    %v385 = vmax.f32 %v369, 0.0
    %v386 = vmax.f32 %v374, 0.0
    %v387 = vmax.f32 %v377, 0.0
    %v388 = vpack.c.bf16 %v381, %v380
    %v389 = vpack.c.bf16 %v383, %v382
    %v390 = vpack.c.bf16 %v385, %v384
    %v391 = vpack.c.bf16 %v387, %v386
    %v392 = vld [vmem:[#allocation7] sm:$0xf]
    %v393 = vld [vmem:[#allocation7 + $0x4] sm:$0xf]
    %v394 = vld [vmem:[#allocation7 + $0x8] sm:$0xf]
    %v395 = vld [vmem:[#allocation7 + $0xc] sm:$0xf]
    %v396 = vld [vmem:[#allocation7 + $0x10] sm:$0xf]
    %v397 = vld [vmem:[#allocation7 + $0x14] sm:$0xf]
    %v398 = vld [vmem:[#allocation7 + $0x18] sm:$0xf]
    %v399 = vld [vmem:[#allocation7 + $0x1c] sm:$0xf]
    %v400 = vld [vmem:[#allocation7 + $0x20] sm:$0xf]
    %v401 = vld [vmem:[#allocation7 + $0x24] sm:$0xf]
    %v402 = vld [vmem:[#allocation7 + $0x28] sm:$0xf]
    %v403 = vld [vmem:[#allocation7 + $0x2c] sm:$0xf]
    %v404 = vld [vmem:[#allocation7 + $0x30] sm:$0xf]
    %v405 = vld [vmem:[#allocation7 + $0x34] sm:$0xf]
    %v406 = vld [vmem:[#allocation7 + $0x38] sm:$0xf]
    %v407 = vld [vmem:[#allocation7 + $0x3c] sm:$0xf]
    %v408 = vlaneseq
    %v409 = vshrl.u32 %v408, 7
    %v410 = vsub.s32 2, %v409
    %v411 = vrot.slane %v104, %v410
    %v428 = vunpack.c.l.b16 %v392
    %v429 = vunpack.c.l.b16 %v393
    %v430 = vunpack.c.l.b16 %v394
    %v431 = vunpack.c.l.b16 %v395
    %v432 = vunpack.c.l.b16 %v396
    %v433 = vunpack.c.l.b16 %v397
    %v434 = vunpack.c.l.b16 %v398
    %v435 = vunpack.c.l.b16 %v399
    %v436 = vunpack.c.l.b16 %v400
    %v437 = vunpack.c.l.b16 %v401
    %v438 = vunpack.c.l.b16 %v402
    %v439 = vunpack.c.l.b16 %v403
    %v440 = vunpack.c.l.b16 %v404
    %v441 = vunpack.c.l.b16 %v405
    %v442 = vunpack.c.l.b16 %v406
    %v443 = vunpack.c.l.b16 %v407
    %v444 = vpack.c.b16 %v429, %v428
    %v445 = vpack.c.b16 %v431, %v430
    %v446 = vpack.c.b16 %v433, %v432
    %v447 = vpack.c.b16 %v435, %v434
    %v448 = vpack.c.b16 %v437, %v436
    %v449 = vpack.c.b16 %v439, %v438
    %v450 = vpack.c.b16 %v441, %v440
    %v451 = vpack.c.b16 %v443, %v442
    %460 = vmatprep.subr.bf16.mxu0 0
    %461 = vmatpush1.bf16.msra.mxu0 %v444
    %462 = vmatprep.subr.bf16.mxu0 0
    %463 = vmatpush1.bf16.msra.mxu0 %v445
    %464 = vmatprep.subr.bf16.mxu0 0
    %465 = vmatpush1.bf16.msra.mxu0 %v446
    %466 = vmatprep.subr.bf16.mxu0 0
    %467 = vmatpush1.bf16.msra.mxu0 %v447
    %468 = vmatprep.subr.bf16.mxu0 0
    %469 = vmatpush1.bf16.msra.mxu0 %v448
    %470 = vmatprep.subr.bf16.mxu0 0
    %471 = vmatpush1.bf16.msra.mxu0 %v449
    %472 = vmatprep.subr.bf16.mxu0 0
    %473 = vmatpush1.bf16.msra.mxu0 %v450
    %474 = vmatprep.subr.bf16.mxu0 0
    %475 = vmatpush1.bf16.msra.mxu0 %v451
    %476 = vmatprep.subr.bf16.mxu0 0
    %477 = vmatpush1.bf16.msra.mxu0 0
    %478 = vmatprep.subr.bf16.mxu0 0
    %479 = vmatpush1.bf16.msra.mxu0 0
    %480 = vmatprep.subr.bf16.mxu0 0
    %481 = vmatpush1.bf16.msra.mxu0 0
    %482 = vmatprep.subr.bf16.mxu0 0
    %483 = vmatpush1.bf16.msra.mxu0 0
    %484 = vmatprep.subr.bf16.mxu0 0
    %485 = vmatpush1.bf16.msra.mxu0 0
    %486 = vmatprep.subr.bf16.mxu0 0
    %487 = vmatpush1.bf16.msra.mxu0 0
    %488 = vmatprep.subr.bf16.mxu0 0
    %489 = vmatpush1.bf16.msra.mxu0 0
    %490 = vmatprep.subr.bf16.mxu0 0
    %491 = vmatpush1.bf16.msra.mxu0 0
    %492 = vmatprep.mubr.bf16.mxu0 0
    %493 = vmatmul.mubr.bf16.gmra.mrb[0].mxu0 %v388
    %v494 = vpop.f32.mrb[0].mxu0
    %v495 = vadd.f32 %v411, %v494
    %v496 = vpop.f32.mrb[0].mxu0
    %v497 = vpop.f32.mrb[0].mxu0
    %v498 = vadd.f32 %v411, %v497
    %v499 = vpop.f32.mrb[0].mxu0
    %500 = vmatprep.mubr.bf16.mxu0 0
    %501 = vmatmul.mubr.bf16.gmra.mrb[0].mxu0 %v389
    %v502 = vpop.f32.mrb[0].mxu0
    %v503 = vadd.f32 %v411, %v502
    %v504 = vpop.f32.mrb[0].mxu0
    %v505 = vpop.f32.mrb[0].mxu0
    %v506 = vadd.f32 %v411, %v505
    %v507 = vpop.f32.mrb[0].mxu0
    %508 = vmatprep.mubr.bf16.mxu0 0
    %509 = vmatmul.mubr.bf16.gmra.mrb[0].mxu0 %v390
    %v510 = vpop.f32.mrb[0].mxu0
    %v511 = vadd.f32 %v411, %v510
    %v512 = vpop.f32.mrb[0].mxu0
    %v513 = vpop.f32.mrb[0].mxu0
    %v514 = vadd.f32 %v411, %v513
    %v515 = vpop.f32.mrb[0].mxu0
    %516 = vmatprep.mubr.bf16.mxu0 0
    %517 = vmatmul.mubr.bf16.gmra.mrb[0].mxu0 %v391
    %v518 = vpop.f32.mrb[0].mxu0
    %v519 = vadd.f32 %v411, %v518
    %v520 = vpop.f32.mrb[0].mxu0
    %v521 = vpop.f32.mrb[0].mxu0
    %v522 = vadd.f32 %v411, %v521
    %v523 = vpop.f32.mrb[0].mxu0
    %524 = vdwg.mxu0
    %v525 = vmax.f32 %v495, 0.0
    %v526 = vmax.f32 %v498, 0.0
    %v527 = vmax.f32 %v503, 0.0
    %v528 = vmax.f32 %v506, 0.0
    %v529 = vmax.f32 %v511, 0.0
    %v530 = vmax.f32 %v514, 0.0
    %v531 = vmax.f32 %v519, 0.0
    %v532 = vmax.f32 %v522, 0.0
    %v533 = vpack.c.bf16 %v526, %v525
    %v534 = vpack.c.bf16 %v528, %v527
    %v535 = vpack.c.bf16 %v530, %v529
    %v536 = vpack.c.bf16 %v532, %v531
    %v537 = vld [vmem:[#allocation9] sm:$0xf]
    %v538 = vld [vmem:[#allocation9 + $0x4] sm:$0xf]
    %v539 = vld [vmem:[#allocation9 + $0x8] sm:$0xf]
    %v540 = vld [vmem:[#allocation9 + $0xc] sm:$0xf]
    %v541 = vld [vmem:[#allocation9 + $0x10] sm:$0xf]
    %v542 = vld [vmem:[#allocation9 + $0x14] sm:$0xf]
    %v543 = vld [vmem:[#allocation9 + $0x18] sm:$0xf]
    %v544 = vld [vmem:[#allocation9 + $0x1c] sm:$0xf]
    %v545 = vld [vmem:[#allocation9 + $0x20] sm:$0xf]
    %v546 = vld [vmem:[#allocation9 + $0x24] sm:$0xf]
    %v547 = vld [vmem:[#allocation9 + $0x28] sm:$0xf]
    %v548 = vld [vmem:[#allocation9 + $0x2c] sm:$0xf]
    %v549 = vld [vmem:[#allocation9 + $0x30] sm:$0xf]
    %v550 = vld [vmem:[#allocation9 + $0x34] sm:$0xf]
    %v551 = vld [vmem:[#allocation9 + $0x38] sm:$0xf]
    %v552 = vld [vmem:[#allocation9 + $0x3c] sm:$0xf]
    %v553 = vlaneseq
    %v554 = vshrl.u32 %v553, 7
    %v555 = vsub.s32 3, %v554
    %v556 = vrot.slane %v104, %v555
    %v573 = vunpack.c.l.b16 %v537
    %v574 = vunpack.c.l.b16 %v538
    %v575 = vunpack.c.l.b16 %v539
    %v576 = vunpack.c.l.b16 %v540
    %v577 = vunpack.c.l.b16 %v541
    %v578 = vunpack.c.l.b16 %v542
    %v579 = vunpack.c.l.b16 %v543
    %v580 = vunpack.c.l.b16 %v544
    %v581 = vunpack.c.l.b16 %v545
    %v582 = vunpack.c.l.b16 %v546
    %v583 = vunpack.c.l.b16 %v547
    %v584 = vunpack.c.l.b16 %v548
    %v585 = vunpack.c.l.b16 %v549
    %v586 = vunpack.c.l.b16 %v550
    %v587 = vunpack.c.l.b16 %v551
    %v588 = vunpack.c.l.b16 %v552
    %v589 = vpack.c.b16 %v574, %v573
    %v590 = vpack.c.b16 %v576, %v575
    %v591 = vpack.c.b16 %v578, %v577
    %v592 = vpack.c.b16 %v580, %v579
    %v593 = vpack.c.b16 %v582, %v581
    %v594 = vpack.c.b16 %v584, %v583
    %v595 = vpack.c.b16 %v586, %v585
    %v596 = vpack.c.b16 %v588, %v587
    %605 = vmatprep.subr.bf16.mxu0 0
    %606 = vmatpush1.bf16.msra.mxu0 %v589
    %607 = vmatprep.subr.bf16.mxu0 0
    %608 = vmatpush1.bf16.msra.mxu0 %v590
    %609 = vmatprep.subr.bf16.mxu0 0
    %610 = vmatpush1.bf16.msra.mxu0 %v591
    %611 = vmatprep.subr.bf16.mxu0 0
    %612 = vmatpush1.bf16.msra.mxu0 %v592
    %613 = vmatprep.subr.bf16.mxu0 0
    %614 = vmatpush1.bf16.msra.mxu0 %v593
    %615 = vmatprep.subr.bf16.mxu0 0
    %616 = vmatpush1.bf16.msra.mxu0 %v594
    %617 = vmatprep.subr.bf16.mxu0 0
    %618 = vmatpush1.bf16.msra.mxu0 %v595
    %619 = vmatprep.subr.bf16.mxu0 0
    %620 = vmatpush1.bf16.msra.mxu0 %v596
    %621 = vmatprep.subr.bf16.mxu0 0
    %622 = vmatpush1.bf16.msra.mxu0 0
    %623 = vmatprep.subr.bf16.mxu0 0
    %624 = vmatpush1.bf16.msra.mxu0 0
    %625 = vmatprep.subr.bf16.mxu0 0
    %626 = vmatpush1.bf16.msra.mxu0 0
    %627 = vmatprep.subr.bf16.mxu0 0
    %628 = vmatpush1.bf16.msra.mxu0 0
    %629 = vmatprep.subr.bf16.mxu0 0
    %630 = vmatpush1.bf16.msra.mxu0 0
    %631 = vmatprep.subr.bf16.mxu0 0
    %632 = vmatpush1.bf16.msra.mxu0 0
    %633 = vmatprep.subr.bf16.mxu0 0
    %634 = vmatpush1.bf16.msra.mxu0 0
    %635 = vmatprep.subr.bf16.mxu0 0
    %636 = vmatpush1.bf16.msra.mxu0 0
    %637 = vmatprep.mubr.bf16.mxu0 0
    %638 = vmatmul.mubr.bf16.gmra.mrb[0].mxu0 %v533
    %v639 = vpop.f32.mrb[0].mxu0
    %v640 = vadd.f32 %v556, %v639
    %v641 = vpop.f32.mrb[0].mxu0
    %v642 = vpop.f32.mrb[0].mxu0
    %v643 = vadd.f32 %v556, %v642
    %v644 = vpop.f32.mrb[0].mxu0
    %645 = vmatprep.mubr.bf16.mxu0 0
    %646 = vmatmul.mubr.bf16.gmra.mrb[0].mxu0 %v534
    %v647 = vpop.f32.mrb[0].mxu0
    %v648 = vadd.f32 %v556, %v647
    %v649 = vpop.f32.mrb[0].mxu0
    %v650 = vpop.f32.mrb[0].mxu0
    %v651 = vadd.f32 %v556, %v650
    %v652 = vpop.f32.mrb[0].mxu0
    %653 = vmatprep.mubr.bf16.mxu0 0
    %654 = vmatmul.mubr.bf16.gmra.mrb[0].mxu0 %v535
    %v655 = vpop.f32.mrb[0].mxu0
    %v656 = vadd.f32 %v556, %v655
    %v657 = vpop.f32.mrb[0].mxu0
    %v658 = vpop.f32.mrb[0].mxu0
    %v659 = vadd.f32 %v556, %v658
    %v660 = vpop.f32.mrb[0].mxu0
    %661 = vmatprep.mubr.bf16.mxu0 0
    %662 = vmatmul.mubr.bf16.gmra.mrb[0].mxu0 %v536
    %v663 = vpop.f32.mrb[0].mxu0
    %v664 = vadd.f32 %v556, %v663
    %v665 = vpop.f32.mrb[0].mxu0
    %v666 = vpop.f32.mrb[0].mxu0
    %v667 = vadd.f32 %v556, %v666
    %v668 = vpop.f32.mrb[0].mxu0
    %669 = vdwg.mxu0
    %vm670 = vcmask 130048
    %671 = vst.msk [vmem:[%s6] sm:$0xff] %vm670, %v640
    %672 = vst.msk [vmem:[%s6 + $0x8] sm:$0xff] %vm670, %v643
    %673 = vst.msk [vmem:[%s6 + $0x10] sm:$0xff] %vm670, %v648
    %674 = vst.msk [vmem:[%s6 + $0x18] sm:$0xff] %vm670, %v651
    %675 = vst.msk [vmem:[%s6 + $0x20] sm:$0xff] %vm670, %v656
    %676 = vst.msk [vmem:[%s6 + $0x28] sm:$0xff] %vm670, %v659
    %677 = vst.msk [vmem:[%s6 + $0x30] sm:$0xff] %vm670, %v664
    %678 = vst.msk [vmem:[%s6 + $0x38] sm:$0xff] %vm670, %v667
    // Predicated region
    $region46: #{tpu_custom_call.1} parent=1 // pred_check
      _
    $region47: #{tpu_custom_call.1} parent=1 // pred_check_branch
      %680 = sbr.rel (0) target = $region49
    $region48: #{tpu_custom_call.1} parent=1 // pred_region
      _
    $region49: #{tpu_custom_call.1} parent=1 // pred_fallthru
      _
    // Predicated region
    $region50: #{tpu_custom_call.1} parent=1 // pred_check
      _
    $region51: #{tpu_custom_call.1} parent=1 // pred_check_branch
      %682 = sbr.rel (0) target = $region53
    $region52: #{tpu_custom_call.1} parent=1 // pred_region
      _
    $region53: #{tpu_custom_call.1} parent=1 // pred_fallthru
      _
    %683 = vsyncpa [#allocation3], 1
    %684 = vsyncpa [#allocation5], 1
    %685 = vsyncpa [#allocation8], 1

</llo_original>
